<compile_context>
chip_gen: v7x
topology: tpu7x:2x2x1
jax: 0.10.0
libtpu: 0.0.40
codegen_flags: <defaults>
</compile_context>

<pallas_src>
import math
import functools

import jax
import jax.numpy as jnp
from jax.experimental import pallas as pl
from jax.experimental.pallas import tpu as pltpu


_LN_EPS = 1e-5


# ----------------------------- helpers ---------------------------------------

def _bytes(shape, dtype):
    return int(math.prod(shape)) * jnp.dtype(dtype).itemsize


@functools.lru_cache(maxsize=None)
def _vmem_capacity_bytes():
    try:
        return int(pltpu.get_tpu_info().vmem_capacity_bytes)
    except Exception:
        return 128 * 1024 * 1024   # v5e/v6e default; only used as a ceiling


def _vmem_limit(block_bytes):
    cap = _vmem_capacity_bytes()
    ceiling = (cap * 7) // 8                      # headroom for compiler scratch
    want = max(32 * 1024 * 1024, 3 * int(block_bytes))
    return int(min(ceiling, want))


@functools.lru_cache(maxsize=None)
def _single_buffer_mode():
    """Return pl.Buffered(1) if single-buffered constant blocks are supported."""
    try:
        mode = pl.Buffered(1)

        def _k(x_ref, o_ref):
            o_ref[...] = x_ref[...] + 1.0

        out = pl.pallas_call(
            _k,
            grid=(2,),
            in_specs=[pl.BlockSpec((8, 128), lambda i: (0, 0),
                                   pipeline_mode=mode)],
            out_specs=pl.BlockSpec((8, 128), lambda i: (0, 0)),
            out_shape=jax.ShapeDtypeStruct((8, 128), jnp.float32),
        )(jnp.zeros((8, 128), jnp.float32))
        jax.block_until_ready(out)
        return mode
    except Exception:
        return None


def _const_spec(shape):
    """BlockSpec for a block that is identical at every grid point (weights/biases)."""
    index_map = lambda *_: (0,) * len(shape)
    mode = _single_buffer_mode()
    if mode is not None:
        return pl.BlockSpec(shape, index_map, pipeline_mode=mode)
    return pl.BlockSpec(shape, index_map)


def _pick_tile(n, candidates):
    for c in candidates:
        if c <= n and n % c == 0:
            return c
    return n


def _pick_time_tile(P, dim, cap):
    budget = cap // 3
    cands = tuple(c for c in (2048, 1024, 512, 256, 128)
                  if 2 * 2 * c * dim <= budget)     # double-buffered bf16 wp tile
    return _pick_tile(P, cands or (128,))


def _pick_hidden_tile(dim, Dt, cap):
    budget = cap // 3
    cands = tuple(c for c in (1024, 512, 256)
                  if 2 * 2 * c * (Dt + dim) <= budget)
    return _pick_tile(dim, cands or (256,))


def _row_tile(n, target=256):
    return target if n > target else max(n, 1)


# ----------------------------- kernels ----------------------------------------

def _temb_kernel(t_ref, w1_ref, b1_ref, w2_ref, b2_ref, temb_ref, act_ref, *,
                 time_freq_dim):
    """Sinusoidal timesteps -> linear1 -> SiLU -> linear2 (temb), plus SiLU(temb)."""
    half = time_freq_dim // 2
    t = t_ref[...]                                                # (B, 1) f32

    # Timesteps(num_channels=F, flip_sin_to_cos=True, downscale_freq_shift=0)
    j = jax.lax.broadcasted_iota(jnp.int32, (1, time_freq_dim), 1)
    idx = jnp.where(j < half, j, j - half).astype(jnp.float32)
    freqs = jnp.exp(-math.log(10000.0) * idx / float(half))
    arg = t * freqs                                               # (B, F)
    emb = jnp.where(j < half, jnp.cos(arg), jnp.sin(arg))         # [cos | sin]

    # TimestepEmbedding: linear_1 -> SiLU -> linear_2   (bf16 MXU, f32 acc)
    h = jnp.dot(emb.astype(jnp.bfloat16), w1_ref[...],
                preferred_element_type=jnp.float32) + b1_ref[...]
    h = h * jax.nn.sigmoid(h)
    temb = jnp.dot(h.astype(jnp.bfloat16), w2_ref[...],
                   preferred_element_type=jnp.float32) + b2_ref[...]

    temb_cast = temb.astype(temb_ref.dtype)       # .type_as(encoder_hidden_states)
    temb_ref[...] = temb_cast
    tc = temb_cast.astype(jnp.float32)
    act_ref[...] = tc * jax.nn.sigmoid(tc)        # act_fn(temb), f32


def _time_proj_kernel(act_ref, wp_ref, bp_ref, o_ref):
    """timestep_proj tile k = SiLU(temb) @ wp[:, k-tile] + bp[k-tile]."""
    o_ref[...] = (jnp.dot(act_ref[...].astype(jnp.bfloat16), wp_ref[...],
                          preferred_element_type=jnp.float32)
                  + bp_ref[...]).astype(o_ref.dtype)


def _text_fused_kernel(x_ref, w1_ref, b1_ref, w2_ref, b2_ref, o_ref):
    """PixArtAlphaTextProjection (both weights VMEM-resident): linear -> gelu_tanh -> linear."""
    h = jnp.dot(x_ref[...].astype(jnp.bfloat16), w1_ref[...],
                preferred_element_type=jnp.float32) + b1_ref[...]
    h = jax.nn.gelu(h, approximate=True)                          # gelu_tanh, f32
    y = jnp.dot(h.astype(jnp.bfloat16), w2_ref[...],
                preferred_element_type=jnp.float32) + b2_ref[...]
    o_ref[...] = y.astype(o_ref.dtype)


def _text_reduce_kernel(x_ref, w1_ref, b1_ref, w2_ref, b2_ref, o_ref):
    """Same projection with the hidden dim tiled as a reduction; accumulate into o_ref."""
    j = pl.program_id(1)
    h = jnp.dot(x_ref[...].astype(jnp.bfloat16), w1_ref[...],
                preferred_element_type=jnp.float32) + b1_ref[...]
    h = jax.nn.gelu(h, approximate=True)
    part = jnp.dot(h.astype(jnp.bfloat16), w2_ref[...],
                   preferred_element_type=jnp.float32)

    @pl.when(j == 0)
    def _():
        o_ref[...] = part + b2_ref[...]

    @pl.when(j > 0)
    def _():
        o_ref[...] = o_ref[...] + part


def _image_kernel(x_ref, g1_ref, be1_ref, w1_ref, b1_ref, w2_ref, b2_ref,
                  g2_ref, be2_ref, o_ref):
    """WanImageEmbedding: FP32LayerNorm -> FF(linear, gelu-exact, linear) -> FP32LayerNorm."""
    x = x_ref[...].astype(jnp.float32)
    mu = jnp.mean(x, axis=-1, keepdims=True)
    var = jnp.mean(jnp.square(x - mu), axis=-1, keepdims=True)
    xn = (x - mu) * jax.lax.rsqrt(var + _LN_EPS) * g1_ref[...] + be1_ref[...]

    h = jnp.dot(xn.astype(jnp.bfloat16), w1_ref[...],
                preferred_element_type=jnp.float32) + b1_ref[...]
    h = jax.nn.gelu(h, approximate=False)                         # exact gelu, f32
    y = jnp.dot(h.astype(jnp.bfloat16), w2_ref[...],
                preferred_element_type=jnp.float32) + b2_ref[...]

    mu2 = jnp.mean(y, axis=-1, keepdims=True)
    var2 = jnp.mean(jnp.square(y - mu2), axis=-1, keepdims=True)
    o_ref[...] = ((y - mu2) * jax.lax.rsqrt(var2 + _LN_EPS) * g2_ref[...]
                  + be2_ref[...]).astype(o_ref.dtype)


# ----------------------------- wrappers ----------------------------------------

def wan_time_text_image_embedding(params, timestep, encoder_hidden_states,
                                  encoder_hidden_states_image=None):
    dim = params["time_w2"].shape[1]
    F = params["time_w1"].shape[0]
    P = params["time_proj_w"].shape[1]
    out_dtype = encoder_hidden_states.dtype
    cap = _vmem_capacity_bytes()

    # ---------------- time path, stage 1: temb (no grid, tiny) ----------------
    B = timestep.shape[0]
    t2d = timestep.astype(jnp.float32).reshape(B, 1)

    temb_blk = (_bytes((B, 1), jnp.float32)
                + _bytes((F, dim), jnp.bfloat16) + _bytes((dim, dim), jnp.bfloat16)
                + 2 * _bytes((1, dim), jnp.float32)
                + _bytes((B, dim), out_dtype) + _bytes((B, dim), jnp.float32))
    temb, act = pl.pallas_call(
        functools.partial(_temb_kernel, time_freq_dim=F),
        out_shape=(jax.ShapeDtypeStruct((B, dim), out_dtype),
                   jax.ShapeDtypeStruct((B, dim), jnp.float32)),
        compiler_params=pltpu.CompilerParams(
            vmem_limit_bytes=_vmem_limit(temb_blk)),
        cost_estimate=pl.CostEstimate(
            flops=int(2 * B * (F * dim + dim * dim)),
            transcendentals=int(B * (F + 3 * dim)),
            bytes_accessed=int(temb_blk)),
    )(t2d, params["time_w1"], params["time_b1"],
      params["time_w2"], params["time_b2"])

    # ---------------- time path, stage 2: time_proj (P tiled, parallel) ----------------
    TP = _pick_time_tile(P, dim, cap)
    tproj_blk = (_bytes((B, dim), jnp.float32)
                 + 2 * (_bytes((dim, TP), jnp.bfloat16) + _bytes((1, TP), jnp.float32))
                 + 2 * _bytes((B, TP), out_dtype))
    timestep_proj = pl.pallas_call(
        _time_proj_kernel,
        grid=(P // TP,),
        in_specs=[
            _const_spec((B, dim)),
            pl.BlockSpec((dim, TP), lambda k: (0, k)),
            pl.BlockSpec((1, TP), lambda k: (0, k)),
        ],
        out_specs=pl.BlockSpec((B, TP), lambda k: (0, k)),
        out_shape=jax.ShapeDtypeStruct((B, P), out_dtype),
        compiler_params=pltpu.CompilerParams(
            dimension_semantics=("parallel",),
            vmem_limit_bytes=_vmem_limit(tproj_blk)),
        cost_estimate=pl.CostEstimate(
            flops=int(2 * B * dim * P),
            transcendentals=0,
            bytes_accessed=int(_bytes((B, dim), jnp.float32)
                               + _bytes((dim, P), jnp.bfloat16)
                               + _bytes((1, P), jnp.float32)
                               + _bytes((B, P), out_dtype))),
    )(act, params["time_proj_w"], params["time_proj_b"])

    # ---------------- text path ----------------
    Bt, S, Dt = encoder_hidden_states.shape
    N = Bt * S
    x = encoder_hidden_states.reshape(N, Dt)
    TM = _row_tile(N)
    n_rows = pl.cdiv(N, TM)

    text_w_bytes = _bytes((Dt, dim), jnp.bfloat16) + _bytes((dim, dim), jnp.bfloat16)
    text_cost = pl.CostEstimate(
        flops=int(2 * N * (Dt * dim + dim * dim)),
        transcendentals=int(N * dim),
        bytes_accessed=int(_bytes((N, Dt), x.dtype) + text_w_bytes
                           + _bytes((N, dim), out_dtype)))

    if text_w_bytes <= (2 * cap) // 5:
        # Both weights fit comfortably: single row-parallel axis, fully fused.
        text_blk = (2 * _bytes((TM, Dt), x.dtype) + text_w_bytes
                    + 2 * _bytes((1, dim), jnp.float32)
                    + 2 * _bytes((TM, dim), out_dtype))
        text_out = pl.pallas_call(
            _text_fused_kernel,
            grid=(n_rows,),
            in_specs=[
                pl.BlockSpec((TM, Dt), lambda i: (i, 0)),
                _const_spec((Dt, dim)),
                _const_spec((1, dim)),
                _const_spec((dim, dim)),
                _const_spec((1, dim)),
            ],
            out_specs=pl.BlockSpec((TM, dim), lambda i: (i, 0)),
            out_shape=jax.ShapeDtypeStruct((N, dim), out_dtype),
            compiler_params=pltpu.CompilerParams(
                dimension_semantics=("parallel",),
                vmem_limit_bytes=_vmem_limit(text_blk)),
            cost_estimate=text_cost,
        )(x, params["text_w1"], params["text_b1"],
          params["text_w2"], params["text_b2"])
    else:
        # Large dims: tile the hidden dim as a trailing reduction, accumulate
        # directly into the resident (TM, dim) output block (f32).
        TD = _pick_hidden_tile(dim, Dt, cap)
        text_blk = (2 * _bytes((TM, Dt), x.dtype)
                    + 2 * (_bytes((Dt, TD), jnp.bfloat16) + _bytes((1, TD), jnp.float32)
                           + _bytes((TD, dim), jnp.bfloat16))
                    + _bytes((1, dim), jnp.float32)
                    + 2 * _bytes((TM, dim), jnp.float32))
        text_out = pl.pallas_call(
            _text_reduce_kernel,
            grid=(n_rows, dim // TD),
            in_specs=[
                pl.BlockSpec((TM, Dt), lambda i, j: (i, 0)),
                pl.BlockSpec((Dt, TD), lambda i, j: (0, j)),
                pl.BlockSpec((1, TD), lambda i, j: (0, j)),
                pl.BlockSpec((TD, dim), lambda i, j: (j, 0)),
                _const_spec((1, dim)),
            ],
            out_specs=pl.BlockSpec((TM, dim), lambda i, j: (i, 0)),
            out_shape=jax.ShapeDtypeStruct((N, dim), jnp.float32),
            compiler_params=pltpu.CompilerParams(
                dimension_semantics=("parallel", "arbitrary"),
                vmem_limit_bytes=_vmem_limit(text_blk)),
            cost_estimate=text_cost,
        )(x, params["text_w1"], params["text_b1"],
          params["text_w2"], params["text_b2"])
        if text_out.dtype != out_dtype:
            text_out = text_out.astype(out_dtype)
    text_out = text_out.reshape(Bt, S, dim)

    # ---------------- image path (optional, row tiled) ----------------
    image_out = None
    if encoder_hidden_states_image is not None:
        Bi, Si, Di = encoder_hidden_states_image.shape
        Ni = Bi * Si
        xi = encoder_hidden_states_image.reshape(Ni, Di)   # no host-side f32 copy
        TMi = _row_tile(Ni)

        img_blk = (2 * _bytes((TMi, Di), xi.dtype)
                   + 3 * _bytes((1, Di), jnp.float32)
                   + _bytes((Di, Di), jnp.bfloat16)
                   + _bytes((Di, dim), jnp.bfloat16)
                   + 3 * _bytes((1, dim), jnp.float32)
                   + 2 * _bytes((TMi, dim), out_dtype))
        img_cost = pl.CostEstimate(
            flops=int(2 * Ni * (Di * Di + Di * dim)),
            transcendentals=int(Ni * Di),
            bytes_accessed=int(_bytes((Ni, Di), xi.dtype)
                               + _bytes((Di, Di), jnp.bfloat16)
                               + _bytes((Di, dim), jnp.bfloat16)
                               + _bytes((Ni, dim), out_dtype)))

        image_out = pl.pallas_call(
            _image_kernel,
            grid=(pl.cdiv(Ni, TMi),),
            in_specs=[
                pl.BlockSpec((TMi, Di), lambda i: (i, 0)),
                _const_spec((1, Di)),
                _const_spec((1, Di)),
                _const_spec((Di, Di)),
                _const_spec((1, Di)),
                _const_spec((Di, dim)),
                _const_spec((1, dim)),
                _const_spec((1, dim)),
                _const_spec((1, dim)),
            ],
            out_specs=pl.BlockSpec((TMi, dim), lambda i: (i, 0)),
            out_shape=jax.ShapeDtypeStruct((Ni, dim), out_dtype),
            compiler_params=pltpu.CompilerParams(
                dimension_semantics=("parallel",),
                vmem_limit_bytes=_vmem_limit(img_blk)),
            cost_estimate=img_cost,
        )(xi,
          params["img_ln1_g"], params["img_ln1_b"],
          params["img_ff_w1"], params["img_ff_b1"],
          params["img_ff_w2"], params["img_ff_b2"],
          params["img_ln2_g"], params["img_ln2_b"])
        image_out = image_out.reshape(Bi, Si, dim)

    return temb, timestep_proj, text_out, image_out


# ----------------------------- params -------------------------------------------

def init_params(key, dim, time_freq_dim, time_proj_dim, text_embed_dim,
                image_embed_dim):
    # Deterministic synthetic init. Matmul weights stored bf16 ([in, out]),
    # biases / LayerNorm affine params stored f32.
    ks = list(jax.random.split(key, 16))

    def lin(k, fi, fo):
        kw, kb = jax.random.split(k)
        w = (jax.random.normal(kw, (fi, fo), jnp.float32)
             / math.sqrt(fi)).astype(jnp.bfloat16)
        b = 0.01 * jax.random.normal(kb, (1, fo), jnp.float32)
        return w, b

    p = {}
    p["time_w1"], p["time_b1"] = lin(ks[0], time_freq_dim, dim)
    p["time_w2"], p["time_b2"] = lin(ks[1], dim, dim)
    p["time_proj_w"], p["time_proj_b"] = lin(ks[2], dim, time_proj_dim)
    p["text_w1"], p["text_b1"] = lin(ks[3], text_embed_dim, dim)
    p["text_w2"], p["text_b2"] = lin(ks[4], dim, dim)
    if image_embed_dim is not None:
        p["img_ln1_g"] = jnp.ones((1, image_embed_dim), jnp.float32)
        p["img_ln1_b"] = jnp.zeros((1, image_embed_dim), jnp.float32)
        p["img_ff_w1"], p["img_ff_b1"] = lin(ks[5], image_embed_dim, image_embed_dim)
        p["img_ff_w2"], p["img_ff_b2"] = lin(ks[6], image_embed_dim, dim)
        p["img_ln2_g"] = jnp.ones((1, dim), jnp.float32)
        p["img_ln2_b"] = jnp.zeros((1, dim), jnp.float32)
    return p


# ----------------------------- main ----------------------------------------------

if __name__ == "__main__":
    # Small, module-consistent shapes (Wan uses time_proj_dim = 6 * dim).
    B = 2
    dim = 128
    time_freq_dim = 64
    time_proj_dim = 6 * dim      # 768 -> exercises the P-tiled time_proj kernel
    text_embed_dim = 128
    image_embed_dim = 64
    seq_text = 16
    seq_img = 8

    root = jax.random.PRNGKey(0)
    kp, kt, ktxt, kimg = jax.random.split(root, 4)

    params = init_params(kp, dim, time_freq_dim, time_proj_dim,
                         text_embed_dim, image_embed_dim)

    timestep = jax.random.uniform(kt, (B,), jnp.float32, 0.0, 1000.0)
    encoder_hidden_states = jax.random.normal(
        ktxt, (B, seq_text, text_embed_dim), jnp.float32)
    encoder_hidden_states_image = jax.random.normal(
        kimg, (B, seq_img, image_embed_dim), jnp.float32)

    temb, timestep_proj, text_out, image_out = wan_time_text_image_embedding(
        params, timestep, encoder_hidden_states, encoder_hidden_states_image)

    jax.block_until_ready((temb, timestep_proj, text_out, image_out))

    assert temb.shape == (B, dim)
    assert timestep_proj.shape == (B, time_proj_dim)
    assert text_out.shape == (B, seq_text, dim)
    assert image_out.shape == (B, seq_img, dim)
    assert bool(jnp.all(jnp.isfinite(temb)))
    assert bool(jnp.all(jnp.isfinite(timestep_proj)))
    assert bool(jnp.all(jnp.isfinite(text_out)))
    assert bool(jnp.all(jnp.isfinite(image_out)))
    print("KERNEL_OK")
</pallas_src>

<mosaic_0001>
module attributes {stable_mosaic.version = 11 : i64} {
  func.func @_temb_kernel(%arg0: memref<2x1xf32, #tpu.memory_space<vmem>>, %arg1: memref<64x128xbf16, #tpu.memory_space<vmem>>, %arg2: memref<1x128xf32, #tpu.memory_space<vmem>>, %arg3: memref<128x128xbf16, #tpu.memory_space<vmem>>, %arg4: memref<1x128xf32, #tpu.memory_space<vmem>>, %arg5: memref<2x128xf32, #tpu.memory_space<vmem>>, %arg6: memref<2x128xf32, #tpu.memory_space<vmem>>) attributes {dimension_semantics = [], scalar_prefetch = 0 : i64, scratch_operands = 0 : i64, tpu.core_type = #tpu.core_type<tc>} {
    %c0 = arith.constant 0 : index
    %c0_0 = arith.constant 0 : index
    %0 = vector.load %arg0[%c0, %c0_0] : memref<2x1xf32, #tpu.memory_space<vmem>>, vector<2x1xf32>
    %1 = tpu.iota {dimensions = array<i32: 1>} : vector<1x64xi32>
    %c32_i32 = arith.constant 32 : i32
    %2 = vector.broadcast %c32_i32 : i32 to vector<1x64xi32>
    %3 = arith.cmpi slt, %1, %2 : vector<1x64xi32>
    %c32_i32_1 = arith.constant 32 : i32
    %4 = vector.broadcast %c32_i32_1 : i32 to vector<1x64xi32>
    %5 = arith.subi %1, %4 : vector<1x64xi32>
    %6 = arith.select %3, %1, %5 : vector<1x64xi1>, vector<1x64xi32>
    %7 = arith.sitofp %6 : vector<1x64xi32> to vector<1x64xf32>
    %cst = arith.constant -9.21034049 : f32
    %8 = vector.broadcast %cst : f32 to vector<1x64xf32>
    %9 = arith.mulf %8, %7 : vector<1x64xf32>
    %cst_2 = arith.constant 3.200000e+01 : f32
    %10 = vector.broadcast %cst_2 : f32 to vector<1x64xf32>
    %11 = arith.divf %9, %10 : vector<1x64xf32>
    %12 = math.exp %11 : vector<1x64xf32>
    %13 = vector.broadcast %0 : vector<2x1xf32> to vector<2x64xf32>
    %14 = vector.broadcast %12 : vector<1x64xf32> to vector<2x64xf32>
    %15 = arith.mulf %13, %14 : vector<2x64xf32>
    %c32_i32_3 = arith.constant 32 : i32
    %16 = vector.broadcast %c32_i32_3 : i32 to vector<1x64xi32>
    %17 = arith.cmpi slt, %1, %16 : vector<1x64xi32>
    %18 = math.cos %15 : vector<2x64xf32>
    %19 = math.sin %15 : vector<2x64xf32>
    %20 = vector.shape_cast %17 : vector<1x64xi1> to vector<1x64xi1>
    %21 = vector.broadcast %20 : vector<1x64xi1> to vector<2x64xi1>
    %22 = arith.select %21, %18, %19 : vector<2x64xi1>, vector<2x64xf32>
    %23 = arith.truncf %22 : vector<2x64xf32> to vector<2x64xbf16>
    %c0_4 = arith.constant 0 : index
    %c0_5 = arith.constant 0 : index
    %24 = vector.load %arg1[%c0_4, %c0_5] : memref<64x128xbf16, #tpu.memory_space<vmem>>, vector<64x128xbf16>
    %cst_6 = arith.constant dense<0.000000e+00> : vector<2x128xf32>
    %25 = tpu.matmul %23, %24, %cst_6 {dimension_numbers = #tpu.dot_dimension_numbers<[1], [0], [0], [1], [0, 0, 1, 1], [], []>} : vector<2x64xbf16>, vector<64x128xbf16>, vector<2x128xf32> -> vector<2x128xf32>
    %c0_7 = arith.constant 0 : index
    %c0_8 = arith.constant 0 : index
    %26 = vector.load %arg2[%c0_7, %c0_8] : memref<1x128xf32, #tpu.memory_space<vmem>>, vector<1x128xf32>
    %27 = vector.broadcast %26 : vector<1x128xf32> to vector<2x128xf32>
    %28 = arith.addf %25, %27 : vector<2x128xf32>
    %29 = arith.negf %28 : vector<2x128xf32>
    %30 = math.exp %29 : vector<2x128xf32>
    %cst_9 = arith.constant 1.000000e+00 : f32
    %31 = vector.broadcast %cst_9 : f32 to vector<2x128xf32>
    %32 = arith.addf %31, %30 : vector<2x128xf32>
    %33 = arith.divf %31, %32 : vector<2x128xf32>
    %34 = arith.mulf %28, %33 : vector<2x128xf32>
    %35 = arith.truncf %34 : vector<2x128xf32> to vector<2x128xbf16>
    %c0_10 = arith.constant 0 : index
    %c0_11 = arith.constant 0 : index
    %36 = vector.load %arg3[%c0_10, %c0_11] : memref<128x128xbf16, #tpu.memory_space<vmem>>, vector<128x128xbf16>
    %cst_12 = arith.constant dense<0.000000e+00> : vector<2x128xf32>
    %37 = tpu.matmul %35, %36, %cst_12 {dimension_numbers = #tpu.dot_dimension_numbers<[1], [0], [0], [1], [0, 0, 1, 1], [], []>} : vector<2x128xbf16>, vector<128x128xbf16>, vector<2x128xf32> -> vector<2x128xf32>
    %c0_13 = arith.constant 0 : index
    %c0_14 = arith.constant 0 : index
    %38 = vector.load %arg4[%c0_13, %c0_14] : memref<1x128xf32, #tpu.memory_space<vmem>>, vector<1x128xf32>
    %39 = vector.broadcast %38 : vector<1x128xf32> to vector<2x128xf32>
    %40 = arith.addf %37, %39 : vector<2x128xf32>
    %c0_15 = arith.constant 0 : index
    %c0_16 = arith.constant 0 : index
    %41 = vector.load %arg5[%c0_15, %c0_16] : memref<2x128xf32, #tpu.memory_space<vmem>>, vector<2x128xf32>
    tpu.vector_store %arg5[%c0_15, %c0_16], %40 {strides = array<i32>} : memref<2x128xf32, #tpu.memory_space<vmem>>, vector<2x128xf32>,
    %42 = arith.negf %40 : vector<2x128xf32>
    %43 = math.exp %42 : vector<2x128xf32>
    %cst_17 = arith.constant 1.000000e+00 : f32
    %44 = vector.broadcast %cst_17 : f32 to vector<2x128xf32>
    %45 = arith.addf %44, %43 : vector<2x128xf32>
    %46 = arith.divf %44, %45 : vector<2x128xf32>
    %47 = arith.mulf %40, %46 : vector<2x128xf32>
    %c0_18 = arith.constant 0 : index
    %c0_19 = arith.constant 0 : index
    %48 = vector.load %arg6[%c0_18, %c0_19] : memref<2x128xf32, #tpu.memory_space<vmem>>, vector<2x128xf32>
    tpu.vector_store %arg6[%c0_18, %c0_19], %47 {strides = array<i32>} : memref<2x128xf32, #tpu.memory_space<vmem>>, vector<2x128xf32>,
    return
  }
}

</mosaic_0001>

<llo_original>
// kernel: tpu_custom_call.1
$region0: #{tpu_custom_call.1}
  #allocation0 [shape = 'u32[]', space=smem, size = 0x4, offset = 0x4, fixed_abs, tag = 'smem constant byte address 0x4 - core index']
  #allocation1 [shape = 'u32[144,128]{1,0:T(1,128)}', space=vmem, size = 0x12000, scoped, tag = 'internal scratch']
  %s0 = inlined_call_operand.vmem [shape: f32[2,1], index: 0, kind: input, shape index: {}]
  %s1 = inlined_call_operand.hbm [shape: bf16[64,128], index: 1, kind: input, shape index: {}]
  %s2 = inlined_call_operand.vmem [shape: f32[1,128], index: 2, kind: input, shape index: {}]
  %s3 = inlined_call_operand.hbm [shape: bf16[128,128], index: 3, kind: input, shape index: {}]
  %s4 = inlined_call_operand.vmem [shape: f32[1,128], index: 4, kind: input, shape index: {}]
  %s5 = inlined_call_operand.hbm [shape: f32[2,128], index: 5, kind: output, shape index: {0}]
  %s6 = inlined_call_operand.hbm [shape: f32[2,128], index: 6, kind: output, shape index: {1}]
  %7 = xla_tuple %s5, %s6
  %s8 = sld [smem:[#allocation0]]
  $region46: #{tpu_custom_call.1} parent=0
    _
  %s10 = ssub.s32 1, %s8
  %s11 = scalar_select 0, %s10, %s8
  $region1: #{tpu_custom_call.1} parent=0
    #allocation2 [shape = 'u8[16384]{0}', space=vmem, size = 0x4000, scoped, tag = 'input window, operand 1, single buffered']
    #allocation3 [shape = 's32[1]{0}', space=sflag, size = 0x4, scoped, tag = 'scoped memory for tpu_custom_call.1']
    #allocation4 [shape = 's32[1]{0}', space=sflag, size = 0x4, scoped, tag = 'scoped memory for tpu_custom_call.1']
    #allocation5 [shape = 'u8[32768]{0}', space=vmem, size = 0x8000, scoped, tag = 'input window, operand 3, single buffered']
    #allocation6 [shape = 's32[1]{0}', space=sflag, size = 0x4, scoped, tag = 'scoped memory for tpu_custom_call.1']
    #allocation7 [shape = 'u8[1024]{0}', space=vmem, size = 0x400, scoped, tag = 'output window, operand 0, single buffered']
    #allocation8 [shape = 'u8[1024]{0}', space=vmem, size = 0x400, scoped, tag = 'output window, operand 1, single buffered']
    #allocation9 [shape = 's32[1]{0}', space=sflag, size = 0x4, scoped, tag = 'scoped memory for tpu_custom_call.1']
    %12 = vsyncpa [#allocation3], 0
    %13 = vsyncpa [#allocation6], 0
    %14 = vsyncpa [#allocation4], 0
    %15 = vsyncpa [#allocation9], 0
    // Predicated region
    $region2: #{tpu_custom_call.1} parent=1 // pred_check
      _
    $region3: #{tpu_custom_call.1} parent=1 // pred_check_branch
      %17 = sbr.rel (0) target = $region5
    $region4: #{tpu_custom_call.1} parent=1 // pred_region
      _
    $region5: #{tpu_custom_call.1} parent=1 // pred_fallthru
      _
    // Predicated region
    $region6: #{tpu_custom_call.1} parent=1 // pred_check
      _
    $region7: #{tpu_custom_call.1} parent=1 // pred_check_branch
      %19 = sbr.rel (0) target = $region9
    $region8: #{tpu_custom_call.1} parent=1 // pred_region
      %s21 = ssub.s32 512, 512
      %22 = vsyncadd [#allocation3], %s21
      %s23 = sshll.u32 [#allocation2], 4
      %s24 = int_to_ptr.vmem [resolvable:$true] %s23
      %29 = dma.hbm_to_vmem [thread:$0]  %s1, 512, %s24, [#allocation3], 64, 64, 4
    $region9: #{tpu_custom_call.1} parent=1 // pred_fallthru
      _
    // Predicated region
    $region10: #{tpu_custom_call.1} parent=1 // pred_check
      _
    $region11: #{tpu_custom_call.1} parent=1 // pred_check_branch
      %31 = sbr.rel (0) target = $region13
    $region12: #{tpu_custom_call.1} parent=1 // pred_region
      _
    $region13: #{tpu_custom_call.1} parent=1 // pred_fallthru
      _
    // Predicated region
    $region14: #{tpu_custom_call.1} parent=1 // pred_check
      _
    $region15: #{tpu_custom_call.1} parent=1 // pred_check_branch
      %33 = sbr.rel (0) target = $region17
    $region16: #{tpu_custom_call.1} parent=1 // pred_region
      %s35 = ssub.s32 1024, 1024
      %36 = vsyncadd [#allocation6], %s35
      %s37 = sshll.u32 [#allocation5], 4
      %s38 = int_to_ptr.vmem [resolvable:$true] %s37
      %43 = dma.hbm_to_vmem [thread:$0]  %s3, 1024, %s38, [#allocation6], 64, 64, 4
    $region17: #{tpu_custom_call.1} parent=1 // pred_fallthru
      _
    // Predicated region
    $region18: #{tpu_custom_call.1} parent=1 // pred_check
      _
    $region19: #{tpu_custom_call.1} parent=1 // pred_check_branch
      %45 = sbr.rel (0) target = $region21
    $region20: #{tpu_custom_call.1} parent=1 // pred_region
      _
    $region21: #{tpu_custom_call.1} parent=1 // pred_fallthru
      _
    // Predicated region
    $region22: #{tpu_custom_call.1} parent=1 // pred_check
      _
    $region23: #{tpu_custom_call.1} parent=1 // pred_check_branch
      %47 = sbr.rel (0) target = $region25
    $region24: #{tpu_custom_call.1} parent=1 // pred_region
      %48 = dma.done [#allocation3], 512
    $region25: #{tpu_custom_call.1} parent=1 // pred_fallthru
      _
    // Predicated region
    $region26: #{tpu_custom_call.1} parent=1 // pred_check
      _
    $region27: #{tpu_custom_call.1} parent=1 // pred_check_branch
      %50 = sbr.rel (0) target = $region29
    $region28: #{tpu_custom_call.1} parent=1 // pred_region
      %51 = dma.done [#allocation6], 1024
    $region29: #{tpu_custom_call.1} parent=1 // pred_fallthru
      _
    %v53 = vld [vmem:[%s0] sm:$0x3]
    %v54 = vlaneseq
    %v55 = vand.u32 %v54, 127
    %vm56 = vcmp.lt.s32.totalorder %v55, 32
    %v57 = vsub.s32 %v55, 32
    %v58 = vsel %vm56, %v55, %v57
    %v59 = vcvt.s32.f32 %v58
    %v60 = vmul.f32 %v59, -9.2103405
    %v61 = vrcp.pop 32.0
    %v62 = vmul.f32 %v60, %v61
    %v63 = vmul.f32 %v62, 1.442695
    %v64 = vpow.pop %v63
    %66 = vset.pattern.permute.xlu0 0
    %67 = vperm.xlu0 %66, %v53
    %v68 = vpop.permute.xlu0 %67
    %v70 = vmul.f32 %v68, %v64
    %v71 = vand.u32 2147483647, %v70
    %vm72 = vcmp.le.f32.partialorder %v71, 0.7853982
    %vm73 = vcmp.lt.s32.totalorder %v70, 0
    %v74 = vand.u32 %v70, 2139095040
    %v75 = vshrl.u32 %v74, 23
    %v76 = vsub.s32 %v75, 127
    %v77 = vand.u32 2147483647, %v70
    %v78 = vand.u32 %v77, 8388607
    %v79 = vor.u32 %v78, 8388608
    %v80 = vsub.s32 0, %v79
    %v81 = vadd.s32 %v76, 1
    %vm82 = vcmp.gt.s32.totalorder %v81, 0
    %v83 = vsel %vm82, %v81, 0
    %v84 = vshrl.u32 %v83, 5
    %v85 = vand.u32 %v83, 31
    %v86 = vsub.s32 32, %v85
    %v87 = vshrl.u32 683565275, %v86
    %v88 = vshll.u32 683565275, %v85
    %v89 = vshrl.u32 2475754826, %v86
    %v90 = vor.u32 %v88, %v89
    %v91 = vshll.u32 2475754826, %v85
    %v92 = vshrl.u32 2131351028, %v86
    %v93 = vor.u32 %v91, %v92
    %v94 = vshll.u32 2131351028, %v85
    %v95 = vshrl.u32 2102212464, %v86
    %v96 = vor.u32 %v94, %v95
    %v97 = vshll.u32 2102212464, %v85
    %v98 = vshrl.u32 920167782, %v86
    %v99 = vor.u32 %v97, %v98
    %v100 = vshll.u32 920167782, %v85
    %v101 = vshrl.u32 1326507024, %v86
    %v102 = vor.u32 %v100, %v101
    %vm103 = vcmp.lt.s32.totalorder %v84, 1
    %vm104 = vcmp.lt.s32.totalorder %v84, 2
    %vm105 = vcmp.lt.s32.totalorder %v84, 3
    %vm106 = vcmp.lt.s32.totalorder %v84, 4
    %v107 = vsel %vm103, %v87, %v90
    %v108 = vsel %vm106, %v96, 2102212464
    %v109 = vsel %vm105, %v93, %v108
    %v110 = vsel %vm104, %v107, %v109
    %v111 = vsel %vm103, %v90, %v93
    %v112 = vsel %vm106, %v99, 920167782
    %v113 = vsel %vm105, %v96, %v112
    %v114 = vsel %vm104, %v111, %v113
    %v115 = vsel %vm103, %v93, %v96
    %v116 = vsel %vm106, %v102, 1326507024
    %v117 = vsel %vm105, %v99, %v116
    %v118 = vsel %vm104, %v115, %v117
    %v119 = vshll.u32 %v79, 8
    %v120 = vmul.u32.u64.compose %v119, %v118
    %v121 = vextract.low.u32 %v120
    %v122 = vextract.high.u32 %v120
    %v123 = vmul.u32.u64.compose %v119, %v114
    %v124 = vextract.low.u32 %v123
    %v125 = vextract.high.u32 %v123
    %v126 = vmul.u32 %v119, %v110
    %v127 = vadd.s32 %v122, %v124
    %vm128 = vc.u32 %v122, %v124
    %v129 = vadd.s32 %v125, 1
    %v130 = vsel %vm128, %v129, %v125
    %v131 = vadd.s32 %v126, %v130
    %v132 = vadd.s32 %v131, 536870912
    %v133 = vshrl.u32 %v132, 30
    %v134 = vshll.u32 %v133, 30
    %v135 = vsub.s32 %v131, %v134
    %vm136 = vcmp.lt.s32.totalorder %v135, 0
    %v137 = vsub.s32 0, %v135
    %v138 = vsel %vm136, %v137, %v135
    %v139 = vclz %v138
    %v140 = vsub.s32 %v139, 2
    %vm141 = vcmp.gt.s32.totalorder 0, %v140
    %v142 = vsel %vm141, 0, %v140
    %v143 = vsub.s32 32, %v142
    %v144 = vshll.u32 %v135, %v142
    %v145 = vshrl.u32 %v127, %v143
    %v146 = vor.u32 %v144, %v145
    %v147 = vsub.s32 4294967266, %v142
    %v148 = vadd.s32 %v147, 127
    %v149 = vshll.u32 %v148, 23
    %v150 = vor.u32 4788187, %v149
    %v151 = vand.u32 2147483647, %v150
    %v153 = vcvt.s32.f32 %v146
    %v154 = vmul.f32 %v153, %v151
    %v155 = vxor.u32 %v154, 2147483648
    %v156 = vsel %vm73, %v155, %v154
    %v157 = vsub.s32 4, %v133
    %v158 = vsel %vm73, %v157, %v133
    %v159 = vsel %vm72, %v70, %v156
    %v160 = vsel %vm72, 0, %v158
    %v161 = vcosq.f32.pop %v159
    %v162 = vsinq.f32.pop %v159
    %vm163 = vweird.f32 %v70
    %v164 = vand.u32 %v160, 3
    %vm165 = vcmp.lt.s32.totalorder %v164, 2
    %vm166 = vcmp.eq.s32.totalorder %v164, 0
    %v167 = vxor.u32 %v162, 2147483648
    %v168 = vsel %vm166, %v161, %v167
    %vm169 = vcmp.eq.s32.totalorder %v164, 2
    %v170 = vxor.u32 %v161, 2147483648
    %v171 = vsel %vm169, %v170, %v162
    %v172 = vsel %vm165, %v168, %v171
    %v173 = vsel %vm163, nan, %v172
    %v174 = vand.u32 2147483647, %v70
    %vm175 = vcmp.le.f32.partialorder %v174, 0.7853982
    %vm176 = vcmp.lt.s32.totalorder %v70, 0
    %v177 = vand.u32 %v70, 2139095040
    %v178 = vshrl.u32 %v177, 23
    %v179 = vsub.s32 %v178, 127
    %v180 = vand.u32 2147483647, %v70
    %v181 = vand.u32 %v180, 8388607
    %v182 = vor.u32 %v181, 8388608
    %v183 = vsub.s32 0, %v182
    %v184 = vadd.s32 %v179, 1
    %vm185 = vcmp.gt.s32.totalorder %v184, 0
    %v186 = vsel %vm185, %v184, 0
    %v187 = vshrl.u32 %v186, 5
    %v188 = vand.u32 %v186, 31
    %v189 = vsub.s32 32, %v188
    %v190 = vshrl.u32 683565275, %v189
    %v191 = vshll.u32 683565275, %v188
    %v192 = vshrl.u32 2475754826, %v189
    %v193 = vor.u32 %v191, %v192
    %v194 = vshll.u32 2475754826, %v188
    %v195 = vshrl.u32 2131351028, %v189
    %v196 = vor.u32 %v194, %v195
    %v197 = vshll.u32 2131351028, %v188
    %v198 = vshrl.u32 2102212464, %v189
    %v199 = vor.u32 %v197, %v198
    %v200 = vshll.u32 2102212464, %v188
    %v201 = vshrl.u32 920167782, %v189
    %v202 = vor.u32 %v200, %v201
    %v203 = vshll.u32 920167782, %v188
    %v204 = vshrl.u32 1326507024, %v189
    %v205 = vor.u32 %v203, %v204
    %vm206 = vcmp.lt.s32.totalorder %v187, 1
    %vm207 = vcmp.lt.s32.totalorder %v187, 2
    %vm208 = vcmp.lt.s32.totalorder %v187, 3
    %vm209 = vcmp.lt.s32.totalorder %v187, 4
    %v210 = vsel %vm206, %v190, %v193
    %v211 = vsel %vm209, %v199, 2102212464
    %v212 = vsel %vm208, %v196, %v211
    %v213 = vsel %vm207, %v210, %v212
    %v214 = vsel %vm206, %v193, %v196
    %v215 = vsel %vm209, %v202, 920167782
    %v216 = vsel %vm208, %v199, %v215
    %v217 = vsel %vm207, %v214, %v216
    %v218 = vsel %vm206, %v196, %v199
    %v219 = vsel %vm209, %v205, 1326507024
    %v220 = vsel %vm208, %v202, %v219
    %v221 = vsel %vm207, %v218, %v220
    %v222 = vshll.u32 %v182, 8
    %v223 = vmul.u32.u64.compose %v222, %v221
    %v224 = vextract.low.u32 %v223
    %v225 = vextract.high.u32 %v223
    %v226 = vmul.u32.u64.compose %v222, %v217
    %v227 = vextract.low.u32 %v226
    %v228 = vextract.high.u32 %v226
    %v229 = vmul.u32 %v222, %v213
    %v230 = vadd.s32 %v225, %v227
    %vm231 = vc.u32 %v225, %v227
    %v232 = vadd.s32 %v228, 1
    %v233 = vsel %vm231, %v232, %v228
    %v234 = vadd.s32 %v229, %v233
    %v235 = vadd.s32 %v234, 536870912
    %v236 = vshrl.u32 %v235, 30
    %v237 = vshll.u32 %v236, 30
    %v238 = vsub.s32 %v234, %v237
    %vm239 = vcmp.lt.s32.totalorder %v238, 0
    %v240 = vsub.s32 0, %v238
    %v241 = vsel %vm239, %v240, %v238
    %v242 = vclz %v241
    %v243 = vsub.s32 %v242, 2
    %vm244 = vcmp.gt.s32.totalorder 0, %v243
    %v245 = vsel %vm244, 0, %v243
    %v246 = vsub.s32 32, %v245
    %v247 = vshll.u32 %v238, %v245
    %v248 = vshrl.u32 %v230, %v246
    %v249 = vor.u32 %v247, %v248
    %v250 = vsub.s32 4294967266, %v245
    %v251 = vadd.s32 %v250, 127
    %v252 = vshll.u32 %v251, 23
    %v253 = vor.u32 4788187, %v252
    %v254 = vand.u32 2147483647, %v253
    %v256 = vcvt.s32.f32 %v249
    %v257 = vmul.f32 %v256, %v254
    %v258 = vxor.u32 %v257, 2147483648
    %v259 = vsel %vm176, %v258, %v257
    %v260 = vsub.s32 4, %v236
    %v261 = vsel %vm176, %v260, %v236
    %v262 = vsel %vm175, %v70, %v259
    %v263 = vsel %vm175, 0, %v261
    %v264 = vcosq.f32.pop %v262
    %v265 = vsinq.f32.pop %v262
    %vm266 = vweird.f32 %v70
    %v267 = vadd.s32 %v263, 3
    %v268 = vand.u32 %v267, 3
    %vm269 = vcmp.lt.s32.totalorder %v268, 2
    %vm270 = vcmp.eq.s32.totalorder %v268, 0
    %v271 = vxor.u32 %v265, 2147483648
    %v272 = vsel %vm270, %v264, %v271
    %vm273 = vcmp.eq.s32.totalorder %v268, 2
    %v274 = vxor.u32 %v264, 2147483648
    %v275 = vsel %vm273, %v274, %v265
    %v276 = vsel %vm269, %v272, %v275
    %v277 = vsel %vm266, nan, %v276
    %v278 = vsel %vm56, 1, 0
    %vm279 = vcmp.eq.s32.totalorder %v278, 1
    %v280 = vsel %vm279, %v173, %v277
    %v281 = vpack.c.bf16 %v280, %v280
    %v282 = vld [vmem:[#allocation2] sm:$0xf]
    %v283 = vld [vmem:[#allocation2 + $0x4] sm:$0xf]
    %v284 = vld [vmem:[#allocation2 + $0x8] sm:$0xf]
    %v285 = vld [vmem:[#allocation2 + $0xc] sm:$0xf]
    %v286 = vld [vmem:[#allocation2 + $0x10] sm:$0xf]
    %v287 = vld [vmem:[#allocation2 + $0x14] sm:$0xf]
    %v288 = vld [vmem:[#allocation2 + $0x18] sm:$0xf]
    %v289 = vld [vmem:[#allocation2 + $0x1c] sm:$0xf]
    %v290 = vld [vmem:[%s2] sm:$0x1]
    %v292 = vlaneseq
    %v293 = vshrl.u32 %v292, 7
    %v294 = vsub.s32 0, %v293
    %v295 = vrot.slane %v290, %v294
    %v305 = vunpack.c.l.b16 %v282
    %v306 = vunpack.c.l.b16 %v283
    %v307 = vunpack.c.l.b16 %v284
    %v308 = vunpack.c.l.b16 %v285
    %v309 = vunpack.c.l.b16 %v286
    %v310 = vunpack.c.l.b16 %v287
    %v311 = vunpack.c.l.b16 %v288
    %v312 = vunpack.c.l.b16 %v289
    %v313 = vpack.c.b16 %v306, %v305
    %v314 = vpack.c.b16 %v308, %v307
    %v315 = vpack.c.b16 %v310, %v309
    %v316 = vpack.c.b16 %v312, %v311
    %vm321 = vcmask 523264
    %v323 = vsel %vm321, %v281, 0
    %325 = vmatprep.subr.bf16.mxu0 0
    %326 = vmatpush1.bf16.msra.mxu0 %v313
    %327 = vmatprep.subr.bf16.mxu0 0
    %328 = vmatpush1.bf16.msra.mxu0 %v314
    %329 = vmatprep.subr.bf16.mxu0 0
    %330 = vmatpush1.bf16.msra.mxu0 %v315
    %331 = vmatprep.subr.bf16.mxu0 0
    %332 = vmatpush1.bf16.msra.mxu0 %v316
    %333 = vmatprep.subr.bf16.mxu0 0
    %334 = vmatpush1.bf16.msra.mxu0 0
    %335 = vmatprep.subr.bf16.mxu0 0
    %336 = vmatpush1.bf16.msra.mxu0 0
    %337 = vmatprep.subr.bf16.mxu0 0
    %338 = vmatpush1.bf16.msra.mxu0 0
    %339 = vmatprep.subr.bf16.mxu0 0
    %340 = vmatpush1.bf16.msra.mxu0 0
    %341 = vmatprep.subr.bf16.mxu0 0
    %342 = vmatpush1.bf16.msra.mxu0 0
    %343 = vmatprep.subr.bf16.mxu0 0
    %344 = vmatpush1.bf16.msra.mxu0 0
    %345 = vmatprep.subr.bf16.mxu0 0
    %346 = vmatpush1.bf16.msra.mxu0 0
    %347 = vmatprep.subr.bf16.mxu0 0
    %348 = vmatpush1.bf16.msra.mxu0 0
    %349 = vmatprep.subr.bf16.mxu0 0
    %350 = vmatpush1.bf16.msra.mxu0 0
    %351 = vmatprep.subr.bf16.mxu0 0
    %352 = vmatpush1.bf16.msra.mxu0 0
    %353 = vmatprep.subr.bf16.mxu0 0
    %354 = vmatpush1.bf16.msra.mxu0 0
    %355 = vmatprep.subr.bf16.mxu0 0
    %356 = vmatpush1.bf16.msra.mxu0 0
    %357 = vmatprep.mubr.bf16.mxu0 0
    %358 = vmatmul.mubr.bf16.gmra.mrb[0].mxu0 %v323
    %v359 = vpop.f32.mrb[0].mxu0
    %v360 = vadd.f32 %v295, %v359
    %v361 = vpop.f32.mrb[0].mxu0
    %v362 = vpop.f32.mrb[0].mxu0
    %v363 = vpop.f32.mrb[0].mxu0
    %364 = vdwg.mxu0
    %v365 = vxor.u32 %v360, 2147483648
    %v366 = vmul.f32 %v365, 1.442695
    %v367 = vpow.pop %v366
    %v368 = vadd.f32 %v367, 1.0
    %v369 = vrcp.pop %v368
    %v370 = vmul.f32 1.0, %v369
    %v371 = vmul.f32 %v360, %v370
    %v372 = vpack.c.bf16 %v371, %v371
    %v373 = vld [vmem:[#allocation5] sm:$0xf]
    %v374 = vld [vmem:[#allocation5 + $0x4] sm:$0xf]
    %v375 = vld [vmem:[#allocation5 + $0x8] sm:$0xf]
    %v376 = vld [vmem:[#allocation5 + $0xc] sm:$0xf]
    %v377 = vld [vmem:[#allocation5 + $0x10] sm:$0xf]
    %v378 = vld [vmem:[#allocation5 + $0x14] sm:$0xf]
    %v379 = vld [vmem:[#allocation5 + $0x18] sm:$0xf]
    %v380 = vld [vmem:[#allocation5 + $0x1c] sm:$0xf]
    %v381 = vld [vmem:[#allocation5 + $0x20] sm:$0xf]
    %v382 = vld [vmem:[#allocation5 + $0x24] sm:$0xf]
    %v383 = vld [vmem:[#allocation5 + $0x28] sm:$0xf]
    %v384 = vld [vmem:[#allocation5 + $0x2c] sm:$0xf]
    %v385 = vld [vmem:[#allocation5 + $0x30] sm:$0xf]
    %v386 = vld [vmem:[#allocation5 + $0x34] sm:$0xf]
    %v387 = vld [vmem:[#allocation5 + $0x38] sm:$0xf]
    %v388 = vld [vmem:[#allocation5 + $0x3c] sm:$0xf]
    %v389 = vld [vmem:[%s4] sm:$0x1]
    %v391 = vlaneseq
    %v392 = vshrl.u32 %v391, 7
    %v393 = vsub.s32 0, %v392
    %v394 = vrot.slane %v389, %v393
    %v412 = vunpack.c.l.b16 %v373
    %v413 = vunpack.c.l.b16 %v374
    %v414 = vunpack.c.l.b16 %v375
    %v415 = vunpack.c.l.b16 %v376
    %v416 = vunpack.c.l.b16 %v377
    %v417 = vunpack.c.l.b16 %v378
    %v418 = vunpack.c.l.b16 %v379
    %v419 = vunpack.c.l.b16 %v380
    %v420 = vunpack.c.l.b16 %v381
    %v421 = vunpack.c.l.b16 %v382
    %v422 = vunpack.c.l.b16 %v383
    %v423 = vunpack.c.l.b16 %v384
    %v424 = vunpack.c.l.b16 %v385
    %v425 = vunpack.c.l.b16 %v386
    %v426 = vunpack.c.l.b16 %v387
    %v427 = vunpack.c.l.b16 %v388
    %v428 = vpack.c.b16 %v413, %v412
    %v429 = vpack.c.b16 %v415, %v414
    %v430 = vpack.c.b16 %v417, %v416
    %v431 = vpack.c.b16 %v419, %v418
    %v432 = vpack.c.b16 %v421, %v420
    %v433 = vpack.c.b16 %v423, %v422
    %v434 = vpack.c.b16 %v425, %v424
    %v435 = vpack.c.b16 %v427, %v426
    %444 = vmatprep.subr.bf16.mxu0 0
    %445 = vmatpush1.bf16.msra.mxu0 %v428
    %446 = vmatprep.subr.bf16.mxu0 0
    %447 = vmatpush1.bf16.msra.mxu0 %v429
    %448 = vmatprep.subr.bf16.mxu0 0
    %449 = vmatpush1.bf16.msra.mxu0 %v430
    %450 = vmatprep.subr.bf16.mxu0 0
    %451 = vmatpush1.bf16.msra.mxu0 %v431
    %452 = vmatprep.subr.bf16.mxu0 0
    %453 = vmatpush1.bf16.msra.mxu0 %v432
    %454 = vmatprep.subr.bf16.mxu0 0
    %455 = vmatpush1.bf16.msra.mxu0 %v433
    %456 = vmatprep.subr.bf16.mxu0 0
    %457 = vmatpush1.bf16.msra.mxu0 %v434
    %458 = vmatprep.subr.bf16.mxu0 0
    %459 = vmatpush1.bf16.msra.mxu0 %v435
    %460 = vmatprep.subr.bf16.mxu0 0
    %461 = vmatpush1.bf16.msra.mxu0 0
    %462 = vmatprep.subr.bf16.mxu0 0
    %463 = vmatpush1.bf16.msra.mxu0 0
    %464 = vmatprep.subr.bf16.mxu0 0
    %465 = vmatpush1.bf16.msra.mxu0 0
    %466 = vmatprep.subr.bf16.mxu0 0
    %467 = vmatpush1.bf16.msra.mxu0 0
    %468 = vmatprep.subr.bf16.mxu0 0
    %469 = vmatpush1.bf16.msra.mxu0 0
    %470 = vmatprep.subr.bf16.mxu0 0
    %471 = vmatpush1.bf16.msra.mxu0 0
    %472 = vmatprep.subr.bf16.mxu0 0
    %473 = vmatpush1.bf16.msra.mxu0 0
    %474 = vmatprep.subr.bf16.mxu0 0
    %475 = vmatpush1.bf16.msra.mxu0 0
    %476 = vmatprep.mubr.bf16.mxu0 0
    %477 = vmatmul.mubr.bf16.gmra.mrb[0].mxu0 %v372
    %v478 = vpop.f32.mrb[0].mxu0
    %v479 = vadd.f32 %v394, %v478
    %v480 = vpop.f32.mrb[0].mxu0
    %v481 = vpop.f32.mrb[0].mxu0
    %v482 = vpop.f32.mrb[0].mxu0
    %483 = vdwg.mxu0
    %484 = vst [vmem:[#allocation7] sm:$0x3] %v479
    %v485 = vxor.u32 %v479, 2147483648
    %v486 = vmul.f32 %v485, 1.442695
    %v487 = vpow.pop %v486
    %v488 = vadd.f32 %v487, 1.0
    %v489 = vrcp.pop %v488
    %v490 = vmul.f32 1.0, %v489
    %v491 = vmul.f32 %v479, %v490
    %492 = vst [vmem:[#allocation8] sm:$0x3] %v491
    // Predicated region
    $region30: #{tpu_custom_call.1} parent=1 // pred_check
      _
    $region31: #{tpu_custom_call.1} parent=1 // pred_check_branch
      %494 = sbr.rel (0) target = $region33
    $region32: #{tpu_custom_call.1} parent=1 // pred_region
      %s496 = ssub.s32 32, 32
      %497 = vsyncadd [#allocation4], %s496
      %s499 = sshll.u32 [#allocation7], 4
      %s500 = int_to_ptr.vmem [resolvable:$true] %s499
      %502 = dma.vmem_to_hbm [thread:$0]  %s500, 32, %s5, [#allocation4]
    $region33: #{tpu_custom_call.1} parent=1 // pred_fallthru
      _
    // Predicated region
    $region34: #{tpu_custom_call.1} parent=1 // pred_check
      _
    $region35: #{tpu_custom_call.1} parent=1 // pred_check_branch
      %504 = sbr.rel (0) target = $region37
    $region36: #{tpu_custom_call.1} parent=1 // pred_region
      %s506 = ssub.s32 32, 32
      %507 = vsyncadd [#allocation9], %s506
      %s509 = sshll.u32 [#allocation8], 4
      %s510 = int_to_ptr.vmem [resolvable:$true] %s509
      %512 = dma.vmem_to_hbm [thread:$0]  %s510, 32, %s6, [#allocation9]
    $region37: #{tpu_custom_call.1} parent=1 // pred_fallthru
      _
    // Predicated region
    $region38: #{tpu_custom_call.1} parent=1 // pred_check
      _
    $region39: #{tpu_custom_call.1} parent=1 // pred_check_branch
      %514 = sbr.rel (0) target = $region41
    $region40: #{tpu_custom_call.1} parent=1 // pred_region
      %515 = dma.done [#allocation4], 32
    $region41: #{tpu_custom_call.1} parent=1 // pred_fallthru
      _
    // Predicated region
    $region42: #{tpu_custom_call.1} parent=1 // pred_check
      _
    $region43: #{tpu_custom_call.1} parent=1 // pred_check_branch
      %517 = sbr.rel (0) target = $region45
    $region44: #{tpu_custom_call.1} parent=1 // pred_region
      %518 = dma.done [#allocation9], 32
    $region45: #{tpu_custom_call.1} parent=1 // pred_fallthru
      _
    %519 = vsyncpa [#allocation3], 1
    %520 = vsyncpa [#allocation6], 1
    %521 = vsyncpa [#allocation4], 1
    %522 = vsyncpa [#allocation9], 1

</llo_original>
